<compile_context>
chip_gen: v6e
topology: v6e:2x2x1
jax: 0.10.0
libtpu: 0.0.40
codegen_flags: <defaults>
</compile_context>

<pallas_src>
import numpy as np
import jax
import jax.numpy as jnp
from jax.experimental import pallas as pl
from jax.experimental.pallas import tpu as pltpu


def _round_up(x, m):
    return ((x + m - 1) // m) * m


def _pick_layer_tile(lp, cp, max_block_bytes=2 << 20):
    """Largest multiple-of-16 divisor of lp whose bf16 logits block stays <= budget
    (keeps double-buffered blocks comfortably inside v7x's 64 MiB VMEM)."""
    cap = max(16, (max_block_bytes // (cp * 2)) // 16 * 16)
    tl = 16
    for cand in range(16, min(lp, cap) + 1, 16):
        if lp % cand == 0:
            tl = cand
    return tl


def _area_kernel(la_ref, mask_ref, shift_ref, coef_ref, loss_ref):
    """mode == 'area': loss += sum_{l,c} sigmoid(la[l,c]-shift[l]) * mask[l,c] * area[l]."""
    i = pl.program_id(0)

    @pl.when(i == 0)
    def _():
        loss_ref[0, 0] = jnp.float32(0.0)

    la = la_ref[...].astype(jnp.float32)            # bf16 -> f32 upcast on load
    m = mask_ref[...].astype(jnp.float32)
    ap = jax.nn.sigmoid(la - shift_ref[...]) * m    # in-kernel fold, f32 EUP sigmoid
    loss_ref[0, 0] += jnp.sum(ap * coef_ref[...])   # coef = output_area, [TL,1] broadcast


def _flops_kernel(la_ref, mask_ref, shift_ref, coef_ref, xin_ref, prev_ref,
                  loss_ref, alive_ref):
    """mode == 'flops': per-tile alive sums into scratch; combine on the last tile."""
    i = pl.program_id(0)
    tl = la_ref.shape[0]

    @pl.when(i == 0)
    def _():
        loss_ref[0, 0] = jnp.float32(0.0)

    la = la_ref[...].astype(jnp.float32)
    m = mask_ref[...].astype(jnp.float32)
    ap = jax.nn.sigmoid(la - shift_ref[...]) * m             # [TL, Cp]
    alive_tile = jnp.sum(ap, axis=-1, keepdims=True)          # [TL, 1] alive out-channels
    row0 = pl.multiple_of(i * tl, tl)
    alive_ref[pl.ds(row0, tl), :] = alive_tile                 # persists across grid steps

    @pl.when(i == pl.num_programs(0) - 1)
    def _():
        alive = alive_ref[...]                                 # [Lp, 1] f32 (padded rows = 0)
        prev = prev_ref[...].astype(jnp.float32)               # [Lp, Lp]
        # Single small MXU matvec; lane-broadcast the RHS so N stays 128-dense.
        alive_b = jnp.broadcast_to(alive, (alive.shape[0], 128))
        pred_in = jnp.dot(prev, alive_b,
                          preferred_element_type=jnp.float32)[:, 0:1]   # [Lp, 1]
        alive_in = xin_ref[...] + pred_in
        # coef = output_area * kernel_size^2 (pre-multiplied on host).
        loss_ref[0, 0] = jnp.sum(coef_ref[...] * alive * alive_in)


def make_budget_loss(mask, shift, area, k2, x_in, prev, mode: str):
    """Build the budget-loss forward for a fixed architecture.

    All static per-layer data is packed once with numpy here; the returned jitted
    function takes only log_alpha (the learned parameter)."""
    assert mode in ('area', 'flops'), 'Can only calculate overhead in area or flops.'
    mask = np.asarray(mask, np.float32)
    shift = np.asarray(shift, np.float32).reshape(-1, 1)
    area = np.asarray(area, np.float32).reshape(-1, 1)
    k2 = np.asarray(k2, np.float32).reshape(-1, 1)
    x_in = np.asarray(x_in, np.float32).reshape(-1, 1)
    prev = np.asarray(prev, np.float32)

    L, C = mask.shape
    Lp = _round_up(max(L, 16), 16)      # sublane-aligned (bf16 native tile = 16 rows)
    Cp = _round_up(max(C, 128), 128)    # lane-dense channels
    TL = _pick_layer_tile(Lp, Cp)
    num_tiles = Lp // TL

    def pad2(a, rows, cols):
        out = np.zeros((rows, cols), np.float32)
        out[:a.shape[0], :a.shape[1]] = a
        return out

    mask_p = jnp.asarray(pad2(mask, Lp, Cp).astype(jnp.bfloat16))
    shift_p = jnp.asarray(pad2(shift, Lp, 1))
    coef = area * k2 if mode == 'flops' else area          # area*k2 pre-multiplied on host
    coef_p = jnp.asarray(pad2(coef, Lp, 1))
    xin_p = jnp.asarray(pad2(x_in, Lp, 1))
    prev_p = jnp.asarray(pad2(prev, Lp, Lp).astype(jnp.bfloat16))

    tile2d = lambda i: (i, 0)
    whole = lambda i: (0, 0)

    in_specs = [
        pl.BlockSpec((TL, Cp), tile2d),     # log_alpha (bf16), tiled over layers
        pl.BlockSpec((TL, Cp), tile2d),     # mask      (bf16), tiled over layers
        pl.BlockSpec((TL, 1), tile2d),      # shift per layer
    ]
    if mode == 'flops':
        in_specs += [
            pl.BlockSpec((Lp, 1), whole),   # coef = area*k2 (resident; used at combine)
            pl.BlockSpec((Lp, 1), whole),   # x_in
            pl.BlockSpec((Lp, Lp), whole),  # predecessor matrix (bf16)
        ]
        static_inputs = (coef_p, xin_p, prev_p)
        scratch = (pltpu.VMEM((Lp, 1), jnp.float32),)   # per-layer alive, grid-persistent
        kernel = _flops_kernel
    else:
        in_specs += [pl.BlockSpec((TL, 1), tile2d)]     # coef = area, tiled
        static_inputs = (coef_p,)
        scratch = ()
        kernel = _area_kernel

    bytes_in = 2 * Lp * Cp * 2 + 3 * Lp * 4
    if mode == 'flops':
        bytes_in += Lp * 4 + Lp * Lp * 2
    cost = pl.CostEstimate(
        flops=4 * Lp * Cp + (2 * Lp * Lp * 128 if mode == 'flops' else 0),
        transcendentals=Lp * Cp,
        bytes_accessed=bytes_in + 4,
    )

    call = pl.pallas_call(
        kernel,
        out_shape=jax.ShapeDtypeStruct((1, 1), jnp.float32),
        grid=(num_tiles,),
        in_specs=in_specs,
        out_specs=pl.BlockSpec(memory_space=pltpu.MemorySpace.SMEM),
        scratch_shapes=scratch,
        compiler_params=pltpu.CompilerParams(
            dimension_semantics=("arbitrary",),          # scalar-loss reduction over tiles
            vmem_limit_bytes=32 * 1024 * 1024,
        ),
        cost_estimate=cost,
    )

    @jax.jit
    def budget_loss(log_alpha):
        # TODO(synk): at scale, store log_alpha pre-padded in bf16 (or use
        # allow_input_fusion) so this single cast+pad fuses away entirely.
        la = jnp.pad(log_alpha.astype(jnp.bfloat16), ((0, Lp - L), (0, Cp - C)))
        out = call(la, mask_p, shift_p, *static_inputs)
        return out.reshape(1)      # matches torch.zeros(1)-shaped loss

    return budget_loss


def budget_loss_ref(log_alpha, mask, shift, area, k2, x_in, prev, mode: str,
                    storage_dtype=jnp.bfloat16):
    """Pure-JAX reference mirroring the PyTorch loops, evaluated at the same
    parameter-storage precision the kernel uses (compute stays f32)."""
    la = log_alpha.astype(storage_dtype).astype(jnp.float32)
    m = mask.astype(storage_dtype).astype(jnp.float32)
    alive_prob = jax.nn.sigmoid(la - shift) * m
    alive = jnp.sum(alive_prob, axis=-1, keepdims=True)
    area_pl = alive * area
    alive_in = x_in + prev @ alive
    flops_pl = area_pl * k2 * alive_in
    per_layer = flops_pl if mode == 'flops' else area_pl
    return jnp.sum(per_layer).reshape(1)


if __name__ == "__main__":
    key = jax.random.PRNGKey(0)

    # Synthetic pruned network: 4 BAR-wrapped conv layers in a chain.
    L = 4                       # number of BARStructuredWrapper layers
    C = 32                      # max out-channel count (kernel pads to 128 lanes)
    out_channels = [4, 8, 16, 8]
    in_channels_x = 4           # net.conv1_1.module.in_channels
    spatial = [16, 16, 8, 8]    # output spatial sizes -> output_area = H*W
    kernel_size = [3, 3, 3, 3]

    # Hard-concrete hyperparameters (standard L0 constants), per layer.
    beta, gamma, zeta = 2.0 / 3.0, -0.1, 1.1
    shift_val = beta * float(np.log(-gamma / zeta))

    log_alpha = jax.random.normal(key, (L, C), dtype=jnp.float32)
    mask_np = np.array(
        [[1.0 if c < out_channels[l] else 0.0 for c in range(C)] for l in range(L)],
        dtype=np.float32)
    mask = jnp.asarray(mask_np)

    shift_np = np.full((L, 1), shift_val, dtype=np.float32)
    area_np = np.array([[float(s * s)] for s in spatial], dtype=np.float32)
    k2_np = np.array([[float(k * k)] for k in kernel_size], dtype=np.float32)

    # Predecessor structure (result of get_previous_name): layer 0 <- 'x',
    # layer l <- layer l-1 for l > 0.
    x_in_np = np.array([[float(in_channels_x)]] + [[0.0]] * (L - 1), dtype=np.float32)
    prev_np = np.zeros((L, L), dtype=np.float32)
    for l in range(1, L):
        prev_np[l, l - 1] = 1.0

    shift_j = jnp.asarray(shift_np)
    area_j = jnp.asarray(area_np)
    k2_j = jnp.asarray(k2_np)
    x_in_j = jnp.asarray(x_in_np)
    prev_j = jnp.asarray(prev_np)

    ok = True
    for mode in ('area', 'flops'):
        loss_fn = make_budget_loss(mask_np, shift_np, area_np, k2_np, x_in_np, prev_np, mode)
        out = loss_fn(log_alpha)
        jax.block_until_ready(out)
        ref = budget_loss_ref(log_alpha, mask, shift_j, area_j, k2_j, x_in_j, prev_j, mode)
        if not np.allclose(np.asarray(out), np.asarray(ref), rtol=1e-5, atol=1e-2):
            ok = False
            print(f"MISMATCH mode={mode}: kernel={out} ref={ref}")

    if ok:
        print("KERNEL_OK")
</pallas_src>

<mosaic_0001>
module attributes {stable_mosaic.version = 11 : i64} {
  func.func @_area_kernel(%arg0: i32, %arg1: memref<16x128xbf16, #tpu.memory_space<vmem>>, %arg2: memref<16x128xbf16, #tpu.memory_space<vmem>>, %arg3: memref<16x1xf32, #tpu.memory_space<vmem>>, %arg4: memref<16x1xf32, #tpu.memory_space<vmem>>, %arg5: memref<1x1xf32, #tpu.memory_space<smem>>) attributes {dimension_semantics = [#tpu.dimension_semantics<arbitrary>], iteration_bounds = array<i64: 1>, scalar_prefetch = 0 : i64, scratch_operands = 0 : i64, tpu.core_type = #tpu.core_type<tc>, window_params = [{transform_indices = @transform_0, window_bounds = array<i64: 16, 128>}, {transform_indices = @transform_1, window_bounds = array<i64: 16, 128>}, {transform_indices = @transform_2, window_bounds = array<i64: 16, 1>}, {transform_indices = @transform_3, window_bounds = array<i64: 16, 1>}, {transform_indices = @transform_4, window_bounds = array<i64: 1, 1>}]} {
    %c0_i32 = arith.constant 0 : i32
    %0 = arith.cmpi eq, %arg0, %c0_i32 : i32
    %1 = arith.extui %0 : i1 to i32
    %c0_i32_0 = arith.constant 0 : i32
    %2 = arith.cmpi ne, %1, %c0_i32_0 : i32
    scf.if %2 {
      %cst_13 = arith.constant 0.000000e+00 : f32
      %c0_14 = arith.constant 0 : index
      %c0_15 = arith.constant 0 : index
      %26 = memref.load %arg5[%c0_14, %c0_15] : memref<1x1xf32, #tpu.memory_space<smem>>
      memref.store %cst_13, %arg5[%c0_14, %c0_15] : memref<1x1xf32, #tpu.memory_space<smem>>
    } else {
    }
    %c0 = arith.constant 0 : index
    %c0_1 = arith.constant 0 : index
    %3 = vector.load %arg1[%c0, %c0_1] : memref<16x128xbf16, #tpu.memory_space<vmem>>, vector<16x128xbf16>
    %4 = arith.extf %3 : vector<16x128xbf16> to vector<16x128xf32>
    %c0_2 = arith.constant 0 : index
    %c0_3 = arith.constant 0 : index
    %5 = vector.load %arg2[%c0_2, %c0_3] : memref<16x128xbf16, #tpu.memory_space<vmem>>, vector<16x128xbf16>
    %6 = arith.extf %5 : vector<16x128xbf16> to vector<16x128xf32>
    %c0_4 = arith.constant 0 : index
    %c0_5 = arith.constant 0 : index
    %7 = vector.load %arg3[%c0_4, %c0_5] : memref<16x1xf32, #tpu.memory_space<vmem>>, vector<16x1xf32>
    %8 = vector.broadcast %7 : vector<16x1xf32> to vector<16x128xf32>
    %9 = arith.subf %4, %8 : vector<16x128xf32>
    %10 = arith.negf %9 : vector<16x128xf32>
    %11 = math.exp %10 : vector<16x128xf32>
    %cst = arith.constant 1.000000e+00 : f32
    %12 = vector.broadcast %cst : f32 to vector<16x128xf32>
    %13 = arith.addf %12, %11 : vector<16x128xf32>
    %14 = arith.divf %12, %13 : vector<16x128xf32>
    %15 = arith.mulf %14, %6 : vector<16x128xf32>
    %c0_6 = arith.constant 0 : index
    %c0_7 = arith.constant 0 : index
    %16 = memref.load %arg5[%c0_6, %c0_7] : memref<1x1xf32, #tpu.memory_space<smem>>
    %c0_8 = arith.constant 0 : index
    %c0_9 = arith.constant 0 : index
    %17 = vector.load %arg4[%c0_8, %c0_9] : memref<16x1xf32, #tpu.memory_space<vmem>>, vector<16x1xf32>
    %18 = vector.broadcast %17 : vector<16x1xf32> to vector<16x128xf32>
    %19 = arith.mulf %15, %18 : vector<16x128xf32>
    %20 = vector.shape_cast %19 : vector<16x128xf32> to vector<1x16x128xf32>
    %cst_10 = arith.constant dense<0.000000e+00> : vector<1xf32>
    %21 = vector.multi_reduction <add>, %20, %cst_10 [1, 2] : vector<1x16x128xf32> to vector<1xf32>
    %22 = vector.shape_cast %21 : vector<1xf32> to vector<1x1x1xf32>
    %23 = vector.extract %22[0, 0, 0] : f32 from vector<1x1x1xf32>
    %24 = arith.addf %16, %23 : f32
    %c0_11 = arith.constant 0 : index
    %c0_12 = arith.constant 0 : index
    %25 = memref.load %arg5[%c0_11, %c0_12] : memref<1x1xf32, #tpu.memory_space<smem>>
    memref.store %24, %arg5[%c0_11, %c0_12] : memref<1x1xf32, #tpu.memory_space<smem>>
    return
  }
  func.func @transform_0(%arg0: i32) -> (i32, i32) {
    %c0_i32 = arith.constant 0 : i32
    %c0_i32_0 = arith.constant 0 : i32
    return %arg0, %c0_i32 : i32, i32
  }
  func.func @transform_1(%arg0: i32) -> (i32, i32) {
    %c0_i32 = arith.constant 0 : i32
    %c0_i32_0 = arith.constant 0 : i32
    return %arg0, %c0_i32 : i32, i32
  }
  func.func @transform_2(%arg0: i32) -> (i32, i32) {
    %c0_i32 = arith.constant 0 : i32
    %c0_i32_0 = arith.constant 0 : i32
    return %arg0, %c0_i32 : i32, i32
  }
  func.func @transform_3(%arg0: i32) -> (i32, i32) {
    %c0_i32 = arith.constant 0 : i32
    %c0_i32_0 = arith.constant 0 : i32
    return %arg0, %c0_i32 : i32, i32
  }
  func.func @transform_4(%arg0: i32) -> (i32, i32) {
    %c0_i32 = arith.constant 0 : i32
    %c0_i32_0 = arith.constant 0 : i32
    %c0_i32_1 = arith.constant 0 : i32
    return %c0_i32, %c0_i32_0 : i32, i32
  }
}

</mosaic_0001>

<llo_original>
// kernel: budget_loss.1
$region0: #{budget_loss.1}
  #allocation0 [shape = 'u32[]', space=smem, size = 0x4, offset = 0x4, fixed_abs, tag = 'smem constant byte address 0x4 - core index']
  #allocation1 [shape = 'u32[144,128]{1,0:T(1,128)}', space=vmem, size = 0x12000, scoped, tag = 'internal scratch']
  %s0 = inlined_call_operand.vmem [shape: bf16[16,128], index: 0, kind: input, shape index: {}]
  %s1 = inlined_call_operand.hbm [shape: bf16[16,128], index: 1, kind: input, shape index: {}]
  %s2 = inlined_call_operand.hbm [shape: f32[16,1], index: 2, kind: input, shape index: {}]
  %s3 = inlined_call_operand.vmem [shape: f32[16,1], index: 3, kind: input, shape index: {}]
  %s4 = inlined_call_operand.hbm [shape: f32[1,1], index: 4, kind: output, shape index: {}]
  %s5 = sld [smem:[#allocation0]]
  $region38: #{budget_loss.1} parent=0
    _
  %s7 = ssub.s32 1, %s5
  %s8 = scalar_select 0, %s7, %s5
  $region1: #{budget_loss.1} parent=0
    #allocation2 [shape = 'u8[4096]{0}', space=vmem, size = 0x1000, scoped, tag = 'input window, operand 1, single buffered']
    #allocation3 [shape = 's32[1]{0}', space=sflag, size = 0x4, scoped, tag = 'scoped memory for budget_loss.1']
    #allocation4 [shape = 's32[1]{0}', space=sflag, size = 0x4, scoped, tag = 'scoped memory for budget_loss.1']
    #allocation5 [shape = 'u8[8192]{0}', space=vmem, size = 0x2000, scoped, tag = 'input window, operand 2, single buffered']
    #allocation6 [shape = 's32[1]{0}', space=sflag, size = 0x4, scoped, tag = 'scoped memory for budget_loss.1']
    #allocation7 [shape = 'u8[512]{0}', space=smem, size = 0x200, scoped, tag = 'output window, operand 0, single buffered']
    %9 = vsyncpa [#allocation3], 0
    %10 = vsyncpa [#allocation6], 0
    %11 = vsyncpa [#allocation4], 0
    // Predicated region
    $region2: #{budget_loss.1} parent=1 // pred_check
      _
    $region3: #{budget_loss.1} parent=1 // pred_check_branch
      %13 = sbr.rel (0) target = $region5
    $region4: #{budget_loss.1} parent=1 // pred_region
      _
    $region5: #{budget_loss.1} parent=1 // pred_fallthru
      _
    // Predicated region
    $region6: #{budget_loss.1} parent=1 // pred_check
      _
    $region7: #{budget_loss.1} parent=1 // pred_check_branch
      %15 = sbr.rel (0) target = $region9
    $region8: #{budget_loss.1} parent=1 // pred_region
      %s17 = ssub.s32 128, 128
      %18 = vsyncadd [#allocation3], %s17
      %s19 = sshll.u32 [#allocation2], 4
      %s20 = int_to_ptr.vmem [resolvable:$true] %s19
      %25 = dma.hbm_to_vmem [thread:$0]  %s1, 128, %s20, [#allocation3], 64, 64, 4
    $region9: #{budget_loss.1} parent=1 // pred_fallthru
      _
    // Predicated region
    $region10: #{budget_loss.1} parent=1 // pred_check
      _
    $region11: #{budget_loss.1} parent=1 // pred_check_branch
      %27 = sbr.rel (0) target = $region13
    $region12: #{budget_loss.1} parent=1 // pred_region
      %s29 = ssub.s32 256, 256
      %30 = vsyncadd [#allocation6], %s29
      %s31 = sshll.u32 [#allocation5], 4
      %s32 = int_to_ptr.vmem [resolvable:$true] %s31
      %37 = dma.hbm_to_vmem [thread:$0]  %s2, 256, %s32, [#allocation6], 128, 128, 8
    $region13: #{budget_loss.1} parent=1 // pred_fallthru
      _
    // Predicated region
    $region14: #{budget_loss.1} parent=1 // pred_check
      _
    $region15: #{budget_loss.1} parent=1 // pred_check_branch
      %39 = sbr.rel (0) target = $region17
    $region16: #{budget_loss.1} parent=1 // pred_region
      _
    $region17: #{budget_loss.1} parent=1 // pred_fallthru
      _
    // Predicated region
    $region18: #{budget_loss.1} parent=1 // pred_check
      _
    $region19: #{budget_loss.1} parent=1 // pred_check_branch
      %41 = sbr.rel (0) target = $region21
    $region20: #{budget_loss.1} parent=1 // pred_region
      %42 = dma.done [#allocation3], 128
    $region21: #{budget_loss.1} parent=1 // pred_fallthru
      _
    // Predicated region
    $region22: #{budget_loss.1} parent=1 // pred_check
      _
    $region23: #{budget_loss.1} parent=1 // pred_check_branch
      %44 = sbr.rel (0) target = $region25
    $region24: #{budget_loss.1} parent=1 // pred_region
      %45 = dma.done [#allocation6], 256
    $region25: #{budget_loss.1} parent=1 // pred_fallthru
      _
    %p46 = scmp.eq.s32.totalorder 0, 0
    // Predicated region
    $region26: #{budget_loss.1} parent=1 // pred_check
      %p47 = pneg %p46
    $region27: #{budget_loss.1} parent=1 // pred_check_branch
      %49 = sbr.rel (%p47) target = $region29
    $region28: #{budget_loss.1} parent=1 // pred_region
      %s50 = scalar_lea.smem [#allocation7], 0
      %51 = sst [smem:[%s50]] 0.0
    $region29: #{budget_loss.1} parent=1 // pred_fallthru
      _
    %v52 = vld [vmem:[%s0] sm:$0xf]
    %v53 = vld [vmem:[%s0 + $0x4] sm:$0xf]
    %v54 = vunpack.c.l.bf16 %v52
    %v55 = vunpack.c.l.bf16 %v53
    %v56 = vld [vmem:[#allocation2] sm:$0xf]
    %v57 = vld [vmem:[#allocation2 + $0x4] sm:$0xf]
    %v58 = vunpack.c.l.bf16 %v56
    %v59 = vunpack.c.l.bf16 %v57
    %v60 = vld [vmem:[#allocation5] sm:$0xff]
    %v61 = vld [vmem:[#allocation5 + $0x8] sm:$0xff]
    %63 = vset.pattern.permute.xlu0 0
    %64 = vperm.xlu0 %63, %v60
    %v65 = vpop.permute.xlu0 %64
    %68 = vset.pattern.permute.xlu0 0
    %69 = vperm.xlu0 %68, %v61
    %v70 = vpop.permute.xlu0 %69
    %v72 = vsub.f32 %v54, %v65
    %v73 = vsub.f32 %v55, %v70
    %v74 = vxor.u32 %v72, 2147483648
    %v75 = vxor.u32 %v73, 2147483648
    %v76 = vmul.f32 %v74, 1.442695
    %v77 = vpow.pop %v76
    %v78 = vmul.f32 %v75, 1.442695
    %v79 = vpow.pop %v78
    %v80 = vadd.f32 %v77, 1.0
    %v81 = vadd.f32 %v79, 1.0
    %v82 = vrcp.pop %v80
    %v83 = vmul.f32 1.0, %v82
    %v84 = vrcp.pop %v81
    %v85 = vmul.f32 1.0, %v84
    %v86 = vmul.f32 %v83, %v58
    %v87 = vmul.f32 %v85, %v59
    %s88 = sld [smem:[#allocation7]]
    %v89 = vld [vmem:[%s3] sm:$0xff]
    %v90 = vld [vmem:[%s3 + $0x8] sm:$0xff]
    %92 = vset.pattern.permute.xlu0 0
    %93 = vperm.xlu0 %92, %v89
    %v94 = vpop.permute.xlu0 %93
    %97 = vset.pattern.permute.xlu0 0
    %98 = vperm.xlu0 %97, %v90
    %v99 = vpop.permute.xlu0 %98
    %v101 = vmul.f32 %v86, %v94
    %v102 = vmul.f32 %v87, %v99
    %v103 = vadd.f32 %v101, %v102
    %104 = vadd.xlane.f32.xlu0 %v103
    %v105 = vpop.xlane.xlu0 %104
    %v106 = vrot.slane %v105, 4
    %v107 = vadd.f32 %v105, %v106
    %v108 = vrot.slane %v107, 2
    %v109 = vadd.f32 %v107, %v108
    %v110 = vrot.slane %v109, 1
    %v111 = vadd.f32 %v109, %v110
    %s112 = vtos %v111
    %s113 = sadd.f32 %s88, %s112
    %s114 = scalar_lea.smem [#allocation7], 0
    %115 = sst [smem:[%s114]] %s113
    // Predicated region
    $region30: #{budget_loss.1} parent=1 // pred_check
      _
    $region31: #{budget_loss.1} parent=1 // pred_check_branch
      %117 = sbr.rel (0) target = $region33
    $region32: #{budget_loss.1} parent=1 // pred_region
      %s119 = ssub.s32 16, 16
      %120 = vsyncadd [#allocation4], %s119
      %123 = dma.smem_to_hbm [#allocation7], 16, %s4, [#allocation4]
    $region33: #{budget_loss.1} parent=1 // pred_fallthru
      _
    // Predicated region
    $region34: #{budget_loss.1} parent=1 // pred_check
      _
    $region35: #{budget_loss.1} parent=1 // pred_check_branch
      %125 = sbr.rel (0) target = $region37
    $region36: #{budget_loss.1} parent=1 // pred_region
      %126 = dma.done [#allocation4], 16
    $region37: #{budget_loss.1} parent=1 // pred_fallthru
      _
    %127 = sfence
    %128 = vsyncpa [#allocation3], 1
    %129 = vsyncpa [#allocation6], 1
    %130 = vsyncpa [#allocation4], 1

</llo_original>
